<compile_context>
chip_gen: v7x
topology: tpu7x:2x2x1
jax: 0.10.0
libtpu: 0.0.40
codegen_flags: <defaults>
</compile_context>

<pallas_src>
import functools

import jax
import jax.numpy as jnp
from jax.experimental import pallas as pl
from jax.experimental.pallas import tpu as pltpu


def _focal_loss_kernel(x_ref, t_ref, out_ref, *, gamma, hard_targets):
    i = pl.program_id(0)

    @pl.when(i == 0)
    def _():
        out_ref[...] = jnp.zeros_like(out_ref)

    x = x_ref[...].astype(jnp.float32)
    t = t_ref[...].astype(jnp.float32)

    # Numerically-stable BCE-with-logits, reduction='none':
    #   ce = max(x, 0) - x*t + log1p(exp(-|x|))
    e = jnp.exp(-jnp.abs(x))
    ce = jnp.maximum(x, 0.0) - x * t + jnp.log1p(e)

    if hard_targets:
        # Hard 0/1 labels: pt = sigmoid(x) if t==1 else 1-sigmoid(x), rebuilt from
        # e = exp(-|x|).  Saves one exp/element (EUP was the binding slot on v7x).
        num = jnp.where((t > 0.5) == (x >= 0.0), 1.0, e)
        pt = num * pl.reciprocal(1.0 + e, approx=True)
    else:
        # Exact soft-target semantics (matches torch reference for any t in [0,1]).
        pt = jnp.exp(-ce)
    one_minus_pt = 1.0 - pt

    g_int = int(gamma)
    if float(gamma) == float(g_int) and g_int >= 0:
        # Integer gamma: explicit multiplies on the VPU instead of pow (2x EUP).
        if g_int == 0:
            focal = ce
        else:
            mod = one_minus_pt
            for _ in range(g_int - 1):
                mod = mod * one_minus_pt
            focal = mod * ce
    else:
        # Guard pow(0, gamma) = exp(gamma*log(0)) against NaN on approx EUP paths.
        focal = jnp.maximum(one_minus_pt, 1e-30) ** gamma * ce

    lanes = x_ref.shape[-1]
    # VPU-only partial accumulation into the vreg-shaped (8, lanes) resident
    # output block; full cross-lane/sublane reduction happens outside the kernel.
    out_ref[...] = out_ref[...] + focal.reshape(-1, 8, lanes).sum(axis=0)


def _bce_focal_xla(x, t, gamma):
    """Plain-XLA focal loss (reduction='none') for the ragged tail."""
    x = x.astype(jnp.float32)
    t = t.astype(jnp.float32)
    ce = jnp.maximum(x, 0.0) - x * t + jnp.log1p(jnp.exp(-jnp.abs(x)))
    pt = jnp.exp(-ce)
    return (1.0 - pt) ** gamma * ce


def focal_loss(inputs, targets, *, gamma=2, alpha=None, reduction="mean",
               tile_rows=8192, lanes=128, hard_targets=False):
    """Focal loss matching the PyTorch module (reduction='mean' or 'sum')."""
    assert reduction in ("mean", "sum"), "only mean/sum reductions implemented"
    assert inputs.shape == targets.shape
    assert alpha is None or isinstance(alpha, (float, int)), \
        "tensor-alpha (scatter_) path not implemented"
    # TODO(synk): tensor-alpha path (scatter_ along dim 1 with integer class
    # targets) has no clean elementwise equivalent here and is not implemented.

    total = int(inputs.size)
    x_flat = inputs.reshape(-1)
    t_flat = targets.reshape(-1)

    # Kernel handles the largest sublane-aligned, tile-divisible prefix; the
    # remainder (< one tile) is handled by XLA below — no full-array pad copy.
    rows_full = total // lanes
    main_rows = (rows_full // 8) * 8
    if main_rows >= 8:
        tr = max(8, (min(int(tile_rows), main_rows) // 8) * 8)
        steps = main_rows // tr
        kernel_rows = steps * tr
    else:
        tr, steps, kernel_rows = 0, 0, 0
    main_elems = kernel_rows * lanes

    partial_sums = []

    if kernel_rows > 0:
        x2 = x_flat[:main_elems].reshape(kernel_rows, lanes)
        t2 = t_flat[:main_elems].reshape(kernel_rows, lanes)

        itemsize = max(jnp.dtype(inputs.dtype).itemsize,
                       jnp.dtype(targets.dtype).itemsize)
        # 2 inputs x 2 pipeline buffers x tile, plus output/headroom.
        vmem_limit_bytes = int(2 * 2 * tr * lanes * itemsize + (4 << 20))

        kernel = functools.partial(
            _focal_loss_kernel,
            gamma=float(gamma),
            hard_targets=bool(hard_targets),
        )

        partial = pl.pallas_call(
            kernel,
            out_shape=jax.ShapeDtypeStruct((8, lanes), jnp.float32),
            grid_spec=pltpu.PrefetchScalarGridSpec(
                num_scalar_prefetch=0,
                grid=(steps,),
                in_specs=[
                    pl.BlockSpec((tr, lanes), lambda i: (i, 0)),
                    pl.BlockSpec((tr, lanes), lambda i: (i, 0)),
                ],
                out_specs=pl.BlockSpec((8, lanes), lambda i: (0, 0)),
            ),
            compiler_params=pltpu.CompilerParams(
                dimension_semantics=("arbitrary",),
                vmem_limit_bytes=vmem_limit_bytes),
        )(x2, t2)
        partial_sums.append(jnp.sum(partial))

    if main_elems < total:
        # Ragged tail (< one tile): tiny elementwise XLA computation.
        partial_sums.append(
            jnp.sum(_bce_focal_xla(x_flat[main_elems:], t_flat[main_elems:],
                                   float(gamma))))

    s = partial_sums[0]
    for p in partial_sums[1:]:
        s = s + p

    # Scalar alpha and mean-normalization fold into the final scalar.
    if alpha is not None:
        s = s * jnp.float32(alpha)
    if reduction == "mean":
        s = s / jnp.float32(total)
    return s


def _focal_loss_ref(inputs, targets, gamma=2, alpha=None, reduction="mean"):
    fl = _bce_focal_xla(inputs, targets, float(gamma))
    if alpha is not None:
        fl = alpha * fl
    return fl.mean() if reduction == "mean" else fl.sum()


if __name__ == "__main__":
    key = jax.random.PRNGKey(0)
    k1, k2, k3, k4 = jax.random.split(key, 4)

    # 1) NCHW logits / binary targets, default tiles, mean reduction.
    shape = (2, 4, 16, 16)
    inputs = jax.random.normal(k1, shape, dtype=jnp.float32)
    targets = jax.random.bernoulli(k2, 0.5, shape).astype(jnp.float32)

    out = focal_loss(inputs, targets, gamma=2, alpha=None, reduction="mean")
    out = jax.block_until_ready(out)
    ref = _focal_loss_ref(inputs, targets, gamma=2, alpha=None, reduction="mean")
    assert jnp.allclose(out, ref, rtol=1e-5, atol=1e-6), (out, ref)

    # 2) Ragged shape: exercises kernel prefix + XLA tail; scalar alpha + sum.
    shape2 = (2, 3, 15, 17)
    inputs2 = jax.random.normal(k3, shape2, dtype=jnp.float32)
    targets2 = jax.random.bernoulli(k4, 0.5, shape2).astype(jnp.float32)

    out2 = focal_loss(inputs2, targets2, gamma=2, alpha=0.25, reduction="sum")
    out2 = jax.block_until_ready(out2)
    ref2 = _focal_loss_ref(inputs2, targets2, gamma=2, alpha=0.25, reduction="sum")
    assert jnp.allclose(out2, ref2, rtol=1e-5, atol=1e-5), (out2, ref2)

    # 3) Multi-step streaming grid (small explicit tile), integer gamma=3.
    out3 = focal_loss(inputs, targets, gamma=3, alpha=None, reduction="mean",
                      tile_rows=8)
    out3 = jax.block_until_ready(out3)
    ref3 = _focal_loss_ref(inputs, targets, gamma=3, alpha=None, reduction="mean")
    assert jnp.allclose(out3, ref3, rtol=1e-5, atol=1e-6), (out3, ref3)

    # 4) Hard-label fast path (2 EUP transcendentals/element instead of 3).
    out4 = focal_loss(inputs2, targets2, gamma=2, alpha=0.25, reduction="sum",
                      hard_targets=True)
    out4 = jax.block_until_ready(out4)
    assert jnp.allclose(out4, ref2, rtol=1e-3, atol=1e-3), (out4, ref2)

    print("KERNEL_OK")
</pallas_src>

<mosaic_0001>
module attributes {stable_mosaic.version = 11 : i64} {
  func.func @_focal_loss_kernel(%arg0: i32, %arg1: memref<16x128xf32, #tpu.memory_space<vmem>>, %arg2: memref<16x128xf32, #tpu.memory_space<vmem>>, %arg3: memref<8x128xf32, #tpu.memory_space<vmem>>) attributes {dimension_semantics = [#tpu.dimension_semantics<arbitrary>], iteration_bounds = array<i64: 1>, scalar_prefetch = 0 : i64, scratch_operands = 0 : i64, tpu.core_type = #tpu.core_type<tc>, window_params = [{transform_indices = @transform_0, window_bounds = array<i64: 16, 128>}, {transform_indices = @transform_1, window_bounds = array<i64: 16, 128>}, {pipeline_mode = #tpu.pipeline_mode<synchronous>, transform_indices = @transform_2, window_bounds = array<i64: 8, 128>}]} {
    %c0_i32 = arith.constant 0 : i32
    %0 = arith.cmpi eq, %arg0, %c0_i32 : i32
    %1 = arith.extui %0 : i1 to i32
    %c0_i32_0 = arith.constant 0 : i32
    %2 = arith.cmpi ne, %1, %c0_i32_0 : i32
    scf.if %2 {
      %cst_12 = arith.constant 0.000000e+00 : f32
      %27 = vector.broadcast %cst_12 : f32 to vector<8x128xf32>
      %c0_13 = arith.constant 0 : index
      %c0_14 = arith.constant 0 : index
      %28 = vector.load %arg3[%c0_13, %c0_14] : memref<8x128xf32, #tpu.memory_space<vmem>>, vector<8x128xf32>
      tpu.vector_store %arg3[%c0_13, %c0_14], %27 {strides = array<i32>} : memref<8x128xf32, #tpu.memory_space<vmem>>, vector<8x128xf32>,
    } else {
    }
    %c0 = arith.constant 0 : index
    %c0_1 = arith.constant 0 : index
    %3 = vector.load %arg1[%c0, %c0_1] : memref<16x128xf32, #tpu.memory_space<vmem>>, vector<16x128xf32>
    %c0_2 = arith.constant 0 : index
    %c0_3 = arith.constant 0 : index
    %4 = vector.load %arg2[%c0_2, %c0_3] : memref<16x128xf32, #tpu.memory_space<vmem>>, vector<16x128xf32>
    %5 = math.absf %3 : vector<16x128xf32>
    %cst = arith.constant 0.000000e+00 : f32
    %6 = vector.broadcast %cst : f32 to vector<16x128xf32>
    %7 = arith.subf %6, %5 : vector<16x128xf32>
    %8 = math.exp %7 : vector<16x128xf32>
    %cst_4 = arith.constant 0.000000e+00 : f32
    %9 = vector.broadcast %cst_4 : f32 to vector<16x128xf32>
    %10 = arith.maximumf %3, %9 : vector<16x128xf32>
    %11 = arith.mulf %3, %4 : vector<16x128xf32>
    %12 = arith.subf %10, %11 : vector<16x128xf32>
    %13 = math.log1p %8 : vector<16x128xf32>
    %14 = arith.addf %12, %13 : vector<16x128xf32>
    %cst_5 = arith.constant 0.000000e+00 : f32
    %15 = vector.broadcast %cst_5 : f32 to vector<16x128xf32>
    %16 = arith.subf %15, %14 : vector<16x128xf32>
    %17 = math.exp %16 : vector<16x128xf32>
    %cst_6 = arith.constant 1.000000e+00 : f32
    %18 = vector.broadcast %cst_6 : f32 to vector<16x128xf32>
    %19 = arith.subf %18, %17 : vector<16x128xf32>
    %20 = arith.mulf %19, %19 : vector<16x128xf32>
    %21 = arith.mulf %20, %14 : vector<16x128xf32>
    %c0_7 = arith.constant 0 : index
    %c0_8 = arith.constant 0 : index
    %22 = vector.load %arg3[%c0_7, %c0_8] : memref<8x128xf32, #tpu.memory_space<vmem>>, vector<8x128xf32>
    %23 = vector.shape_cast %21 : vector<16x128xf32> to vector<2x8x128xf32>
    %cst_9 = arith.constant dense<0.000000e+00> : vector<8x128xf32>
    %24 = vector.multi_reduction <add>, %23, %cst_9 [0] : vector<2x8x128xf32> to vector<8x128xf32>
    %25 = arith.addf %22, %24 : vector<8x128xf32>
    %c0_10 = arith.constant 0 : index
    %c0_11 = arith.constant 0 : index
    %26 = vector.load %arg3[%c0_10, %c0_11] : memref<8x128xf32, #tpu.memory_space<vmem>>, vector<8x128xf32>
    tpu.vector_store %arg3[%c0_10, %c0_11], %25 {strides = array<i32>} : memref<8x128xf32, #tpu.memory_space<vmem>>, vector<8x128xf32>,
    return
  }
  func.func @transform_0(%arg0: i32) -> (i32, i32) {
    %c0_i32 = arith.constant 0 : i32
    %c0_i32_0 = arith.constant 0 : i32
    return %arg0, %c0_i32 : i32, i32
  }
  func.func @transform_1(%arg0: i32) -> (i32, i32) {
    %c0_i32 = arith.constant 0 : i32
    %c0_i32_0 = arith.constant 0 : i32
    return %arg0, %c0_i32 : i32, i32
  }
  func.func @transform_2(%arg0: i32) -> (i32, i32) {
    %c0_i32 = arith.constant 0 : i32
    %c0_i32_0 = arith.constant 0 : i32
    %c0_i32_1 = arith.constant 0 : i32
    return %c0_i32, %c0_i32_0 : i32, i32
  }
}

</mosaic_0001>

<llo_original>
// kernel: tpu_custom_call.1
$region0: #{tpu_custom_call.1}
  #allocation0 [shape = 'u32[]', space=smem, size = 0x4, offset = 0x4, fixed_abs, tag = 'smem constant byte address 0x4 - core index']
  #allocation1 [shape = 'u32[144,128]{1,0:T(1,128)}', space=vmem, size = 0x12000, scoped, tag = 'internal scratch']
  %s0 = inlined_call_operand.hbm [shape: f32[16,128], index: 0, kind: input, shape index: {}]
  %s1 = inlined_call_operand.hbm [shape: f32[16,128], index: 1, kind: input, shape index: {}]
  %s2 = inlined_call_operand.hbm [shape: f32[8,128], index: 2, kind: output, shape index: {}]
  %s3 = sld [smem:[#allocation0]]
  $region30: #{tpu_custom_call.1} parent=0
    _
  %s5 = ssub.s32 1, %s3
  %s6 = scalar_select 0, %s5, %s3
  $region1: #{tpu_custom_call.1} parent=0
    #allocation2 [shape = 'u8[8192]{0}', space=vmem, size = 0x2000, scoped, tag = 'input window, operand 0, single buffered']
    #allocation3 [shape = 's32[1]{0}', space=sflag, size = 0x4, scoped, tag = 'scoped memory for tpu_custom_call.1']
    #allocation4 [shape = 's32[1]{0}', space=sflag, size = 0x4, scoped, tag = 'scoped memory for tpu_custom_call.1']
    #allocation5 [shape = 'u8[8192]{0}', space=vmem, size = 0x2000, scoped, tag = 'input window, operand 1, single buffered']
    #allocation6 [shape = 's32[1]{0}', space=sflag, size = 0x4, scoped, tag = 'scoped memory for tpu_custom_call.1']
    #allocation7 [shape = 'u8[4096]{0}', space=vmem, size = 0x1000, scoped, tag = 'output window, operand 0, single buffered']
    %7 = vsyncpa [#allocation3], 0
    %8 = vsyncpa [#allocation6], 0
    %9 = vsyncpa [#allocation4], 0
    // Predicated region
    $region2: #{tpu_custom_call.1} parent=1 // pred_check
      _
    $region3: #{tpu_custom_call.1} parent=1 // pred_check_branch
      %11 = sbr.rel (0) target = $region5
    $region4: #{tpu_custom_call.1} parent=1 // pred_region
      %s13 = ssub.s32 256, 256
      %14 = vsyncadd [#allocation3], %s13
      %s15 = sshll.u32 [#allocation2], 4
      %s16 = int_to_ptr.vmem [resolvable:$true] %s15
      %21 = dma.hbm_to_vmem [thread:$0]  %s0, 256, %s16, [#allocation3], 128, 128, 8
    $region5: #{tpu_custom_call.1} parent=1 // pred_fallthru
      _
    // Predicated region
    $region6: #{tpu_custom_call.1} parent=1 // pred_check
      _
    $region7: #{tpu_custom_call.1} parent=1 // pred_check_branch
      %23 = sbr.rel (0) target = $region9
    $region8: #{tpu_custom_call.1} parent=1 // pred_region
      %s25 = ssub.s32 256, 256
      %26 = vsyncadd [#allocation6], %s25
      %s27 = sshll.u32 [#allocation5], 4
      %s28 = int_to_ptr.vmem [resolvable:$true] %s27
      %33 = dma.hbm_to_vmem [thread:$0]  %s1, 256, %s28, [#allocation6], 128, 128, 8
    $region9: #{tpu_custom_call.1} parent=1 // pred_fallthru
      _
    // Predicated region
    $region10: #{tpu_custom_call.1} parent=1 // pred_check
      _
    $region11: #{tpu_custom_call.1} parent=1 // pred_check_branch
      %35 = sbr.rel (0) target = $region13
    $region12: #{tpu_custom_call.1} parent=1 // pred_region
      %36 = dma.done [#allocation3], 256
    $region13: #{tpu_custom_call.1} parent=1 // pred_fallthru
      _
    // Predicated region
    $region14: #{tpu_custom_call.1} parent=1 // pred_check
      _
    $region15: #{tpu_custom_call.1} parent=1 // pred_check_branch
      %38 = sbr.rel (0) target = $region17
    $region16: #{tpu_custom_call.1} parent=1 // pred_region
      %39 = dma.done [#allocation6], 256
    $region17: #{tpu_custom_call.1} parent=1 // pred_fallthru
      _
    %p40 = scmp.eq.s32.totalorder 0, 0
    // Predicated region
    $region18: #{tpu_custom_call.1} parent=1 // pred_check
      %p41 = pneg %p40
    $region19: #{tpu_custom_call.1} parent=1 // pred_check_branch
      %43 = sbr.rel (%p41) target = $region21
    $region20: #{tpu_custom_call.1} parent=1 // pred_region
      %44 = vst [vmem:[#allocation7] sm:$0xff] 0.0
    $region21: #{tpu_custom_call.1} parent=1 // pred_fallthru
      _
    %v45 = vld [vmem:[#allocation2] sm:$0xff]
    %v46 = vld [vmem:[#allocation2 + $0x8] sm:$0xff]
    %v47 = vld [vmem:[#allocation5] sm:$0xff]
    %v48 = vld [vmem:[#allocation5 + $0x8] sm:$0xff]
    %v49 = vand.u32 2147483647, %v45
    %v50 = vand.u32 2147483647, %v46
    %v51 = vsub.f32 0.0, %v49
    %v52 = vsub.f32 0.0, %v50
    %v53 = vmul.f32 %v51, 1.442695
    %v54 = vpow.pop %v53
    %v55 = vmul.f32 %v52, 1.442695
    %v56 = vpow.pop %v55
    %v57 = vmax.f32 %v45, 0.0
    %v58 = vmax.f32 %v46, 0.0
    %v59 = vmul.f32 %v45, %v47
    %v60 = vmul.f32 %v46, %v48
    %v61 = vsub.f32 %v57, %v59
    %v62 = vsub.f32 %v58, %v60
    %v63 = vadd.f32 %v54, 1.0
    %v64 = vlog2.pop %v63
    %v65 = vmul.f32 %v64, 0.6931472
    %v66 = vmul.f32 -0.5, %v54
    %v67 = vadd.f32 %v66, 1.0
    %v68 = vmul.f32 %v67, %v54
    %v69 = vand.u32 2147483647, %v54
    %vm70 = vcmp.lt.f32.partialorder %v69, 0.0004427343
    %v71 = vsel %vm70, %v68, %v65
    %v72 = vadd.f32 %v56, 1.0
    %v73 = vlog2.pop %v72
    %v74 = vmul.f32 %v73, 0.6931472
    %v75 = vmul.f32 -0.5, %v56
    %v76 = vadd.f32 %v75, 1.0
    %v77 = vmul.f32 %v76, %v56
    %v78 = vand.u32 2147483647, %v56
    %vm79 = vcmp.lt.f32.partialorder %v78, 0.0004427343
    %v80 = vsel %vm79, %v77, %v74
    %v81 = vadd.f32 %v61, %v71
    %v82 = vadd.f32 %v62, %v80
    %v83 = vsub.f32 0.0, %v81
    %v84 = vsub.f32 0.0, %v82
    %v85 = vmul.f32 %v83, 1.442695
    %v86 = vpow.pop %v85
    %v87 = vmul.f32 %v84, 1.442695
    %v88 = vpow.pop %v87
    %v89 = vsub.f32 1.0, %v86
    %v90 = vsub.f32 1.0, %v88
    %v91 = vmul.f32 %v89, %v89
    %v92 = vmul.f32 %v90, %v90
    %v93 = vmul.f32 %v91, %v81
    %v94 = vmul.f32 %v92, %v82
    %v95 = vld [vmem:[#allocation7] sm:$0xff]
    %v96 = vadd.f32 %v93, %v94
    %v97 = vadd.f32 %v95, %v96
    %98 = vst [vmem:[#allocation7] sm:$0xff] %v97
    // Predicated region
    $region22: #{tpu_custom_call.1} parent=1 // pred_check
      _
    $region23: #{tpu_custom_call.1} parent=1 // pred_check_branch
      %100 = sbr.rel (0) target = $region25
    $region24: #{tpu_custom_call.1} parent=1 // pred_region
      %s102 = ssub.s32 128, 128
      %103 = vsyncadd [#allocation4], %s102
      %s105 = sshll.u32 [#allocation7], 4
      %s106 = int_to_ptr.vmem [resolvable:$true] %s105
      %108 = dma.vmem_to_hbm [thread:$0]  %s106, 128, %s2, [#allocation4]
    $region25: #{tpu_custom_call.1} parent=1 // pred_fallthru
      _
    // Predicated region
    $region26: #{tpu_custom_call.1} parent=1 // pred_check
      _
    $region27: #{tpu_custom_call.1} parent=1 // pred_check_branch
      %110 = sbr.rel (0) target = $region29
    $region28: #{tpu_custom_call.1} parent=1 // pred_region
      %111 = dma.done [#allocation4], 128
    $region29: #{tpu_custom_call.1} parent=1 // pred_fallthru
      _
    %112 = vsyncpa [#allocation3], 1
    %113 = vsyncpa [#allocation6], 1
    %114 = vsyncpa [#allocation4], 1

</llo_original>
